<compile_context>
chip_gen: v7x
topology: tpu7x:2x2x1
jax: 0.10.0
libtpu: 0.0.40
codegen_flags: <defaults>
</compile_context>

<pallas_src>
import jax
import jax.numpy as jnp
from jax import lax
from jax.experimental import pallas as pl
from jax.experimental.pallas import tpu as pltpu

H1, H2 = 128, 256  # hidden widths of the Critic


def critic_kernel(x_ref, w1_ref, b1_ref, w2_ref, b2_ref, w3_ref, o_ref):
    # Layer 1 + ReLU: contract (H1, S) with (TB, S) over S -> (H1, TB).
    # Batch stays on the lane dim; Mosaic handles the RHS transpose.
    h1 = lax.dot_general(
        w1_ref[...], x_ref[...],
        dimension_numbers=(((1,), (1,)), ((), ())),
        preferred_element_type=jnp.float32)
    h1 = jnp.maximum(h1 + b1_ref[...], 0.0)

    # Layer 2 + ReLU: (H2, H1) @ (H1, TB) -> (H2, TB)
    h2 = jnp.dot(w2_ref[...], h1, preferred_element_type=jnp.float32)
    h2 = jnp.maximum(h2 + b2_ref[...], 0.0)

    # Layer 3 on the MXU (M=1 matmul): (1, H2) @ (H2, TB) -> (1, TB).
    # Keeps the already-busy VALU slot free; output store is lane-dense.
    out = jnp.dot(w3_ref[...], h2, preferred_element_type=jnp.float32)
    o_ref[...] = out.astype(o_ref.dtype)


def critic_forward(x, params):
    """Fused Critic forward: x (B, S) float32 -> (B, 1) float32."""
    w1, b1, w2, b2, w3, b3 = params          # PyTorch layout: W (out, in), b (out,)
    B, S = x.shape

    # ---- Batch-tile sizing ---------------------------------------------------
    #  * multiple of 128 (lane dim of every intermediate)
    #  * cap 2048 to amortize ~0.35us/step grid overhead
    #  * >= 2 grid steps when B_pad >= 256 so "parallel" can shard across v7x's
    #    two TensorCores
    #  * VMEM guard: x double buffer + resident weights + h1/h2 intermediates
    #    must fit a ~24 MiB budget (v7x scoped default is 32 MiB).
    b128 = pl.cdiv(B, 128) * 128
    if b128 >= 256:
        TB = min(2048, pl.cdiv(pl.cdiv(b128, 2), 128) * 128)
    else:
        TB = b128
    vmem_budget = 24 * 1024 * 1024
    weight_bytes = 4 * (H1 * S + H1 + H2 * H1 + H2 + H2)
    per_col_bytes = 4 * (2 * S + H1 + H2 + 2 * 8)   # x dbl-buf + h1/h2 + out dbl-buf
    tb_cap = max(128, ((vmem_budget - weight_bytes) // per_col_bytes) // 128 * 128)
    TB = max(128, min(TB, tb_cap))

    B_pad = pl.cdiv(B, TB) * TB
    grid = (B_pad // TB,)

    # Only a zero-pad on the batch dim (no transpose); identity when B % TB == 0.
    x_pad = jnp.pad(x, ((0, B_pad - B), (0, 0))) if B_pad != B else x

    # Column-vector biases broadcast over the lane (batch) dim.
    b1c = b1.reshape(H1, 1)
    b2c = b2.reshape(H2, 1)
    w3r = w3.reshape(1, H2)

    # Constant index_map => block never changes => resident in VMEM across steps.
    resident = lambda shape: pl.BlockSpec(shape, lambda i: (0, 0))

    flops = 2 * B_pad * (S * H1 + H1 * H2 + H2)
    bytes_accessed = 4 * (B_pad * S + S * H1 + H1 + H1 * H2 + H2 + H2 + B_pad)

    out = pl.pallas_call(
        critic_kernel,
        out_shape=jax.ShapeDtypeStruct((1, B_pad), jnp.float32),
        grid=grid,
        in_specs=[
            pl.BlockSpec((TB, S), lambda i: (i, 0)),   # x tile, natural layout, pipelined
            resident((H1, S)), resident((H1, 1)),      # weights/biases: resident
            resident((H2, H1)), resident((H2, 1)),
            resident((1, H2)),
        ],
        out_specs=pl.BlockSpec((1, TB), lambda i: (0, i)),   # lane-dense output
        compiler_params=pltpu.CompilerParams(
            dimension_semantics=("parallel",)),        # shard tiles across v7x TCs
        cost_estimate=pl.CostEstimate(
            flops=flops, transcendentals=0, bytes_accessed=bytes_accessed),
    )(x_pad, w1, b1c, w2, b2c, w3r)

    # Scalar bias b3 added here (cheaper than a padded (1,1) VMEM block + DMA).
    return out[0, :B].reshape(B, 1) + b3


def init_params(key, state_dim):
    """PyTorch nn.Linear default init: U[-1/sqrt(fan_in), 1/sqrt(fan_in)]."""
    def linear(key, fan_in, fan_out):
        kw, kb = jax.random.split(key)
        bound = float(fan_in) ** -0.5
        w = jax.random.uniform(kw, (fan_out, fan_in), jnp.float32, -bound, bound)
        b = jax.random.uniform(kb, (fan_out,), jnp.float32, -bound, bound)
        return w, b

    k1, k2, k3 = jax.random.split(key, 3)
    w1, b1 = linear(k1, state_dim, H1)
    w2, b2 = linear(k2, H1, H2)
    w3, b3 = linear(k3, H2, 1)
    return (w1, b1, w2, b2, w3, b3)


def reference_forward(x, params):
    w1, b1, w2, b2, w3, b3 = params
    h1 = jnp.maximum(x @ w1.T + b1, 0.0)
    h2 = jnp.maximum(h1 @ w2.T + b2, 0.0)
    return h2 @ w3.T + b3


if __name__ == "__main__":
    key = jax.random.PRNGKey(0)
    k_params, k_x = jax.random.split(key)

    batch = 8
    state_dim = 32

    params = init_params(k_params, state_dim)
    x = jax.random.normal(k_x, (batch, state_dim), dtype=jnp.float32)

    out = critic_forward(x, params)
    out = jax.block_until_ready(out)

    ref = reference_forward(x, params)
    assert out.shape == (batch, 1)
    assert jnp.allclose(out, ref, atol=1e-4, rtol=1e-4)

    print("KERNEL_OK")
</pallas_src>

<mosaic_0001>
module attributes {stable_mosaic.version = 11 : i64} {
  func.func @critic_kernel(%arg0: i32, %arg1: memref<128x32xf32, #tpu.memory_space<vmem>>, %arg2: memref<128x32xf32, #tpu.memory_space<vmem>>, %arg3: memref<128x1xf32, #tpu.memory_space<vmem>>, %arg4: memref<256x128xf32, #tpu.memory_space<vmem>>, %arg5: memref<256x1xf32, #tpu.memory_space<vmem>>, %arg6: memref<1x256xf32, #tpu.memory_space<vmem>>, %arg7: memref<1x128xf32, #tpu.memory_space<vmem>>) attributes {dimension_semantics = [#tpu.dimension_semantics<parallel>], iteration_bounds = array<i64: 1>, scalar_prefetch = 0 : i64, scratch_operands = 0 : i64, tpu.core_type = #tpu.core_type<tc>, window_params = [{transform_indices = @transform_0, window_bounds = array<i64: 128, 32>}, {pipeline_mode = #tpu.pipeline_mode<synchronous>, transform_indices = @transform_1, window_bounds = array<i64: 128, 32>}, {pipeline_mode = #tpu.pipeline_mode<synchronous>, transform_indices = @transform_2, window_bounds = array<i64: 128, 1>}, {pipeline_mode = #tpu.pipeline_mode<synchronous>, transform_indices = @transform_3, window_bounds = array<i64: 256, 128>}, {pipeline_mode = #tpu.pipeline_mode<synchronous>, transform_indices = @transform_4, window_bounds = array<i64: 256, 1>}, {pipeline_mode = #tpu.pipeline_mode<synchronous>, transform_indices = @transform_5, window_bounds = array<i64: 1, 256>}, {transform_indices = @transform_6, window_bounds = array<i64: 1, 128>}]} {
    %c0 = arith.constant 0 : index
    %c0_0 = arith.constant 0 : index
    %0 = vector.load %arg2[%c0, %c0_0] : memref<128x32xf32, #tpu.memory_space<vmem>>, vector<128x32xf32>
    %c0_1 = arith.constant 0 : index
    %c0_2 = arith.constant 0 : index
    %1 = vector.load %arg1[%c0_1, %c0_2] : memref<128x32xf32, #tpu.memory_space<vmem>>, vector<128x32xf32>
    %cst = arith.constant dense<0.000000e+00> : vector<128x128xf32>
    %2 = tpu.matmul %0, %1, %cst {dimension_numbers = #tpu.dot_dimension_numbers<[1], [1], [0], [0], [0, 0, 1, 0], [], []>} : vector<128x32xf32>, vector<128x32xf32>, vector<128x128xf32> -> vector<128x128xf32>
    %c0_3 = arith.constant 0 : index
    %c0_4 = arith.constant 0 : index
    %3 = vector.load %arg3[%c0_3, %c0_4] : memref<128x1xf32, #tpu.memory_space<vmem>>, vector<128x1xf32>
    %4 = vector.broadcast %3 : vector<128x1xf32> to vector<128x128xf32>
    %5 = arith.addf %2, %4 : vector<128x128xf32>
    %cst_5 = arith.constant 0.000000e+00 : f32
    %6 = vector.broadcast %cst_5 : f32 to vector<128x128xf32>
    %7 = arith.maximumf %5, %6 : vector<128x128xf32>
    %c0_6 = arith.constant 0 : index
    %c0_7 = arith.constant 0 : index
    %8 = vector.load %arg4[%c0_6, %c0_7] : memref<256x128xf32, #tpu.memory_space<vmem>>, vector<256x128xf32>
    %cst_8 = arith.constant dense<0.000000e+00> : vector<256x128xf32>
    %9 = tpu.matmul %8, %7, %cst_8 {dimension_numbers = #tpu.dot_dimension_numbers<[1], [0], [0], [1], [0, 0, 1, 1], [], []>} : vector<256x128xf32>, vector<128x128xf32>, vector<256x128xf32> -> vector<256x128xf32>
    %c0_9 = arith.constant 0 : index
    %c0_10 = arith.constant 0 : index
    %10 = vector.load %arg5[%c0_9, %c0_10] : memref<256x1xf32, #tpu.memory_space<vmem>>, vector<256x1xf32>
    %11 = vector.broadcast %10 : vector<256x1xf32> to vector<256x128xf32>
    %12 = arith.addf %9, %11 : vector<256x128xf32>
    %cst_11 = arith.constant 0.000000e+00 : f32
    %13 = vector.broadcast %cst_11 : f32 to vector<256x128xf32>
    %14 = arith.maximumf %12, %13 : vector<256x128xf32>
    %c0_12 = arith.constant 0 : index
    %c0_13 = arith.constant 0 : index
    %15 = vector.load %arg6[%c0_12, %c0_13] : memref<1x256xf32, #tpu.memory_space<vmem>>, vector<1x256xf32>
    %cst_14 = arith.constant dense<0.000000e+00> : vector<1x128xf32>
    %16 = tpu.matmul %15, %14, %cst_14 {dimension_numbers = #tpu.dot_dimension_numbers<[1], [0], [0], [1], [0, 0, 1, 1], [], []>} : vector<1x256xf32>, vector<256x128xf32>, vector<1x128xf32> -> vector<1x128xf32>
    %c0_15 = arith.constant 0 : index
    %c0_16 = arith.constant 0 : index
    %17 = vector.load %arg7[%c0_15, %c0_16] : memref<1x128xf32, #tpu.memory_space<vmem>>, vector<1x128xf32>
    tpu.vector_store %arg7[%c0_15, %c0_16], %16 {strides = array<i32>} : memref<1x128xf32, #tpu.memory_space<vmem>>, vector<1x128xf32>,
    return
  }
  func.func @transform_0(%arg0: i32) -> (i32, i32) {
    %c0_i32 = arith.constant 0 : i32
    %c0_i32_0 = arith.constant 0 : i32
    return %arg0, %c0_i32 : i32, i32
  }
  func.func @transform_1(%arg0: i32) -> (i32, i32) {
    %c0_i32 = arith.constant 0 : i32
    %c0_i32_0 = arith.constant 0 : i32
    %c0_i32_1 = arith.constant 0 : i32
    return %c0_i32, %c0_i32_0 : i32, i32
  }
  func.func @transform_2(%arg0: i32) -> (i32, i32) {
    %c0_i32 = arith.constant 0 : i32
    %c0_i32_0 = arith.constant 0 : i32
    %c0_i32_1 = arith.constant 0 : i32
    return %c0_i32, %c0_i32_0 : i32, i32
  }
  func.func @transform_3(%arg0: i32) -> (i32, i32) {
    %c0_i32 = arith.constant 0 : i32
    %c0_i32_0 = arith.constant 0 : i32
    %c0_i32_1 = arith.constant 0 : i32
    return %c0_i32, %c0_i32_0 : i32, i32
  }
  func.func @transform_4(%arg0: i32) -> (i32, i32) {
    %c0_i32 = arith.constant 0 : i32
    %c0_i32_0 = arith.constant 0 : i32
    %c0_i32_1 = arith.constant 0 : i32
    return %c0_i32, %c0_i32_0 : i32, i32
  }
  func.func @transform_5(%arg0: i32) -> (i32, i32) {
    %c0_i32 = arith.constant 0 : i32
    %c0_i32_0 = arith.constant 0 : i32
    %c0_i32_1 = arith.constant 0 : i32
    return %c0_i32, %c0_i32_0 : i32, i32
  }
  func.func @transform_6(%arg0: i32) -> (i32, i32) {
    %c0_i32 = arith.constant 0 : i32
    %c0_i32_0 = arith.constant 0 : i32
    return %c0_i32, %arg0 : i32, i32
  }
}

</mosaic_0001>

<llo_original>
// kernel: tpu_custom_call.1
$region0: #{tpu_custom_call.1}
  #allocation0 [shape = 'u32[]', space=smem, size = 0x4, offset = 0x4, fixed_abs, tag = 'smem constant byte address 0x4 - core index']
  #allocation1 [shape = 'u32[144,128]{1,0:T(1,128)}', space=vmem, size = 0x12000, scoped, tag = 'internal scratch']
  %s0 = inlined_call_operand.vmem [shape: f32[128,32], index: 0, kind: input, shape index: {}]
  %s1 = inlined_call_operand.vmem [shape: f32[128,32], index: 1, kind: input, shape index: {}]
  %s2 = inlined_call_operand.vmem [shape: f32[128,1], index: 2, kind: input, shape index: {}]
  %s3 = inlined_call_operand.vmem [shape: f32[256,128], index: 3, kind: input, shape index: {}]
  %s4 = inlined_call_operand.vmem [shape: f32[256,1], index: 4, kind: input, shape index: {}]
  %s5 = inlined_call_operand.vmem [shape: f32[1,256], index: 5, kind: input, shape index: {}]
  %s6 = inlined_call_operand.hbm [shape: f32[1,128], index: 6, kind: output, shape index: {}]
  %s7 = sld [smem:[#allocation0]]
  $region34: #{tpu_custom_call.1} parent=0
    _
  %s9 = ssub.s32 1, %s7
  %s10 = scalar_select 0, %s9, %s7
  $region1: #{tpu_custom_call.1} parent=0
    #allocation2 [shape = 'u8[512]{0}', space=vmem, size = 0x400, scoped, tag = 'output window, operand 0, single buffered']
    #allocation3 [shape = 's32[1]{0}', space=sflag, size = 0x4, scoped, tag = 'scoped memory for tpu_custom_call.1']
    %11 = vsyncpa [#allocation3], 0
    // Predicated region
    $region2: #{tpu_custom_call.1} parent=1 // pred_check
      _
    $region3: #{tpu_custom_call.1} parent=1 // pred_check_branch
      %13 = sbr.rel (0) target = $region5
    $region4: #{tpu_custom_call.1} parent=1 // pred_region
      _
    $region5: #{tpu_custom_call.1} parent=1 // pred_fallthru
      _
    // Predicated region
    $region6: #{tpu_custom_call.1} parent=1 // pred_check
      _
    $region7: #{tpu_custom_call.1} parent=1 // pred_check_branch
      %15 = sbr.rel (0) target = $region9
    $region8: #{tpu_custom_call.1} parent=1 // pred_region
      _
    $region9: #{tpu_custom_call.1} parent=1 // pred_fallthru
      _
    // Predicated region
    $region10: #{tpu_custom_call.1} parent=1 // pred_check
      _
    $region11: #{tpu_custom_call.1} parent=1 // pred_check_branch
      %17 = sbr.rel (0) target = $region13
    $region12: #{tpu_custom_call.1} parent=1 // pred_region
      _
    $region13: #{tpu_custom_call.1} parent=1 // pred_fallthru
      _
    // Predicated region
    $region14: #{tpu_custom_call.1} parent=1 // pred_check
      _
    $region15: #{tpu_custom_call.1} parent=1 // pred_check_branch
      %19 = sbr.rel (0) target = $region17
    $region16: #{tpu_custom_call.1} parent=1 // pred_region
      _
    $region17: #{tpu_custom_call.1} parent=1 // pred_fallthru
      _
    // Predicated region
    $region18: #{tpu_custom_call.1} parent=1 // pred_check
      _
    $region19: #{tpu_custom_call.1} parent=1 // pred_check_branch
      %21 = sbr.rel (0) target = $region21
    $region20: #{tpu_custom_call.1} parent=1 // pred_region
      _
    $region21: #{tpu_custom_call.1} parent=1 // pred_fallthru
      _
    // Predicated region
    $region22: #{tpu_custom_call.1} parent=1 // pred_check
      _
    $region23: #{tpu_custom_call.1} parent=1 // pred_check_branch
      %23 = sbr.rel (0) target = $region25
    $region24: #{tpu_custom_call.1} parent=1 // pred_region
      _
    $region25: #{tpu_custom_call.1} parent=1 // pred_fallthru
      _
    %v24 = vld [vmem:[%s1] sm:$0xff]
    %v25 = vld [vmem:[%s1 + $0x8] sm:$0xff]
    %v26 = vld [vmem:[%s1 + $0x10] sm:$0xff]
    %v27 = vld [vmem:[%s1 + $0x18] sm:$0xff]
    %v28 = vld [vmem:[%s1 + $0x20] sm:$0xff]
    %v29 = vld [vmem:[%s1 + $0x28] sm:$0xff]
    %v30 = vld [vmem:[%s1 + $0x30] sm:$0xff]
    %v31 = vld [vmem:[%s1 + $0x38] sm:$0xff]
    %v32 = vld [vmem:[%s1 + $0x40] sm:$0xff]
    %v33 = vld [vmem:[%s1 + $0x48] sm:$0xff]
    %v34 = vld [vmem:[%s1 + $0x50] sm:$0xff]
    %v35 = vld [vmem:[%s1 + $0x58] sm:$0xff]
    %v36 = vld [vmem:[%s1 + $0x60] sm:$0xff]
    %v37 = vld [vmem:[%s1 + $0x68] sm:$0xff]
    %v38 = vld [vmem:[%s1 + $0x70] sm:$0xff]
    %v39 = vld [vmem:[%s1 + $0x78] sm:$0xff]
    %v40 = vld [vmem:[%s0] sm:$0xff]
    %v41 = vld [vmem:[%s0 + $0x8] sm:$0xff]
    %v42 = vld [vmem:[%s0 + $0x10] sm:$0xff]
    %v43 = vld [vmem:[%s0 + $0x18] sm:$0xff]
    %v44 = vld [vmem:[%s0 + $0x20] sm:$0xff]
    %v45 = vld [vmem:[%s0 + $0x28] sm:$0xff]
    %v46 = vld [vmem:[%s0 + $0x30] sm:$0xff]
    %v47 = vld [vmem:[%s0 + $0x38] sm:$0xff]
    %v48 = vld [vmem:[%s0 + $0x40] sm:$0xff]
    %v49 = vld [vmem:[%s0 + $0x48] sm:$0xff]
    %v50 = vld [vmem:[%s0 + $0x50] sm:$0xff]
    %v51 = vld [vmem:[%s0 + $0x58] sm:$0xff]
    %v52 = vld [vmem:[%s0 + $0x60] sm:$0xff]
    %v53 = vld [vmem:[%s0 + $0x68] sm:$0xff]
    %v54 = vld [vmem:[%s0 + $0x70] sm:$0xff]
    %v55 = vld [vmem:[%s0 + $0x78] sm:$0xff]
    %v56 = vld [vmem:[%s2] sm:$0xff]
    %v57 = vld [vmem:[%s2 + $0x8] sm:$0xff]
    %v58 = vld [vmem:[%s2 + $0x10] sm:$0xff]
    %v59 = vld [vmem:[%s2 + $0x18] sm:$0xff]
    %v60 = vld [vmem:[%s2 + $0x20] sm:$0xff]
    %v61 = vld [vmem:[%s2 + $0x28] sm:$0xff]
    %v62 = vld [vmem:[%s2 + $0x30] sm:$0xff]
    %v63 = vld [vmem:[%s2 + $0x38] sm:$0xff]
    %v64 = vld [vmem:[%s2 + $0x40] sm:$0xff]
    %v65 = vld [vmem:[%s2 + $0x48] sm:$0xff]
    %v66 = vld [vmem:[%s2 + $0x50] sm:$0xff]
    %v67 = vld [vmem:[%s2 + $0x58] sm:$0xff]
    %v68 = vld [vmem:[%s2 + $0x60] sm:$0xff]
    %v69 = vld [vmem:[%s2 + $0x68] sm:$0xff]
    %v70 = vld [vmem:[%s2 + $0x70] sm:$0xff]
    %v71 = vld [vmem:[%s2 + $0x78] sm:$0xff]
    %73 = vset.pattern.permute.xlu0 0
    %74 = vperm.xlu0 %73, %v56
    %v75 = vpop.permute.xlu0 %74
    %78 = vset.pattern.permute.xlu0 0
    %79 = vperm.xlu0 %78, %v57
    %v80 = vpop.permute.xlu0 %79
    %83 = vset.pattern.permute.xlu0 0
    %84 = vperm.xlu0 %83, %v58
    %v85 = vpop.permute.xlu0 %84
    %88 = vset.pattern.permute.xlu0 0
    %89 = vperm.xlu0 %88, %v59
    %v90 = vpop.permute.xlu0 %89
    %93 = vset.pattern.permute.xlu0 0
    %94 = vperm.xlu0 %93, %v60
    %v95 = vpop.permute.xlu0 %94
    %98 = vset.pattern.permute.xlu0 0
    %99 = vperm.xlu0 %98, %v61
    %v100 = vpop.permute.xlu0 %99
    %103 = vset.pattern.permute.xlu0 0
    %104 = vperm.xlu0 %103, %v62
    %v105 = vpop.permute.xlu0 %104
    %108 = vset.pattern.permute.xlu0 0
    %109 = vperm.xlu0 %108, %v63
    %v110 = vpop.permute.xlu0 %109
    %113 = vset.pattern.permute.xlu0 0
    %114 = vperm.xlu0 %113, %v64
    %v115 = vpop.permute.xlu0 %114
    %118 = vset.pattern.permute.xlu0 0
    %119 = vperm.xlu0 %118, %v65
    %v120 = vpop.permute.xlu0 %119
    %123 = vset.pattern.permute.xlu0 0
    %124 = vperm.xlu0 %123, %v66
    %v125 = vpop.permute.xlu0 %124
    %128 = vset.pattern.permute.xlu0 0
    %129 = vperm.xlu0 %128, %v67
    %v130 = vpop.permute.xlu0 %129
    %133 = vset.pattern.permute.xlu0 0
    %134 = vperm.xlu0 %133, %v68
    %v135 = vpop.permute.xlu0 %134
    %138 = vset.pattern.permute.xlu0 0
    %139 = vperm.xlu0 %138, %v69
    %v140 = vpop.permute.xlu0 %139
    %143 = vset.pattern.permute.xlu0 0
    %144 = vperm.xlu0 %143, %v70
    %v145 = vpop.permute.xlu0 %144
    %148 = vset.pattern.permute.xlu0 0
    %149 = vperm.xlu0 %148, %v71
    %v150 = vpop.permute.xlu0 %149
    %vm152 = vcmask 261120
    %v154 = vsel %vm152, %v24, 0
    %v157 = vsel %vm152, %v25, 0
    %v160 = vsel %vm152, %v26, 0
    %v163 = vsel %vm152, %v27, 0
    %v166 = vsel %vm152, %v28, 0
    %v169 = vsel %vm152, %v29, 0
    %v172 = vsel %vm152, %v30, 0
    %v175 = vsel %vm152, %v31, 0
    %v178 = vsel %vm152, %v32, 0
    %v181 = vsel %vm152, %v33, 0
    %v184 = vsel %vm152, %v34, 0
    %v187 = vsel %vm152, %v35, 0
    %v190 = vsel %vm152, %v36, 0
    %v193 = vsel %vm152, %v37, 0
    %v196 = vsel %vm152, %v38, 0
    %v199 = vsel %vm152, %v39, 0
    %v202 = vsel %vm152, %v40, 0
    %v205 = vsel %vm152, %v41, 0
    %v208 = vsel %vm152, %v42, 0
    %v211 = vsel %vm152, %v43, 0
    %v214 = vsel %vm152, %v44, 0
    %v217 = vsel %vm152, %v45, 0
    %v220 = vsel %vm152, %v46, 0
    %v223 = vsel %vm152, %v47, 0
    %v226 = vsel %vm152, %v48, 0
    %v229 = vsel %vm152, %v49, 0
    %v232 = vsel %vm152, %v50, 0
    %v235 = vsel %vm152, %v51, 0
    %v238 = vsel %vm152, %v52, 0
    %v241 = vsel %vm152, %v53, 0
    %v244 = vsel %vm152, %v54, 0
    %v247 = vsel %vm152, %v55, 0
    %249 = vmatprep.subr.mxu0 0.0
    %250 = vmatpush1.xpose.msra.mxu0 %v202
    %251 = vmatprep.subr.mxu0 0.0
    %252 = vmatpush1.xpose.msra.mxu0 %v205
    %253 = vmatprep.subr.mxu0 0.0
    %254 = vmatpush1.xpose.msra.mxu0 %v208
    %255 = vmatprep.subr.mxu0 0.0
    %256 = vmatpush1.xpose.msra.mxu0 %v211
    %257 = vmatprep.subr.mxu0 0.0
    %258 = vmatpush1.xpose.msra.mxu0 %v214
    %259 = vmatprep.subr.mxu0 0.0
    %260 = vmatpush1.xpose.msra.mxu0 %v217
    %261 = vmatprep.subr.mxu0 0.0
    %262 = vmatpush1.xpose.msra.mxu0 %v220
    %263 = vmatprep.subr.mxu0 0.0
    %264 = vmatpush1.xpose.msra.mxu0 %v223
    %265 = vmatprep.subr.mxu0 0.0
    %266 = vmatpush1.xpose.msra.mxu0 %v226
    %267 = vmatprep.subr.mxu0 0.0
    %268 = vmatpush1.xpose.msra.mxu0 %v229
    %269 = vmatprep.subr.mxu0 0.0
    %270 = vmatpush1.xpose.msra.mxu0 %v232
    %271 = vmatprep.subr.mxu0 0.0
    %272 = vmatpush1.xpose.msra.mxu0 %v235
    %273 = vmatprep.subr.mxu0 0.0
    %274 = vmatpush1.xpose.msra.mxu0 %v238
    %275 = vmatprep.subr.mxu0 0.0
    %276 = vmatpush1.xpose.msra.mxu0 %v241
    %277 = vmatprep.subr.mxu0 0.0
    %278 = vmatpush1.xpose.msra.mxu0 %v244
    %279 = vmatprep.subr.mxu0 0.0
    %280 = vmatpush1.xpose.msra.mxu0 %v247
    %281 = vmatprep.subr.mxu0 0.0
    %282 = vmatpush1.xpose.msra.mxu0 0.0
    %283 = vmatprep.subr.mxu0 0.0
    %284 = vmatpush1.xpose.msra.mxu0 0.0
    %285 = vmatprep.subr.mxu0 0.0
    %286 = vmatpush1.xpose.msra.mxu0 0.0
    %287 = vmatprep.subr.mxu0 0.0
    %288 = vmatpush1.xpose.msra.mxu0 0.0
    %289 = vmatprep.subr.mxu0 0.0
    %290 = vmatpush1.xpose.msra.mxu0 0.0
    %291 = vmatprep.subr.mxu0 0.0
    %292 = vmatpush1.xpose.msra.mxu0 0.0
    %293 = vmatprep.subr.mxu0 0.0
    %294 = vmatpush1.xpose.msra.mxu0 0.0
    %295 = vmatprep.subr.mxu0 0.0
    %296 = vmatpush1.xpose.msra.mxu0 0.0
    %297 = vmatprep.subr.mxu0 0.0
    %298 = vmatpush1.xpose.msra.mxu0 0.0
    %299 = vmatprep.subr.mxu0 0.0
    %300 = vmatpush1.xpose.msra.mxu0 0.0
    %301 = vmatprep.subr.mxu0 0.0
    %302 = vmatpush1.xpose.msra.mxu0 0.0
    %303 = vmatprep.subr.mxu0 0.0
    %304 = vmatpush1.xpose.msra.mxu0 0.0
    %305 = vmatprep.subr.mxu0 0.0
    %306 = vmatpush1.xpose.msra.mxu0 0.0
    %307 = vmatprep.subr.mxu0 0.0
    %308 = vmatpush1.xpose.msra.mxu0 0.0
    %309 = vmatprep.subr.mxu0 0.0
    %310 = vmatpush1.xpose.msra.mxu0 0.0
    %311 = vmatprep.subr.mxu0 0.0
    %312 = vmatpush1.xpose.msra.mxu0 0.0
    %313 = vmatprep.mubr.f32.mxu0 0.0
    %314 = vmatmul.mubr.f32.gmra.mrb[0].mxu0 %v154
    %v315 = vpop.f32.mrb[0].mxu0
    %v316 = vadd.f32 %v75, %v315
    %v317 = vpop.f32.mrb[0].mxu0
    %318 = vmatprep.mubr.f32.mxu0 0.0
    %319 = vmatmul.mubr.f32.gmra.mrb[0].mxu0 %v157
    %v320 = vpop.f32.mrb[0].mxu0
    %v321 = vadd.f32 %v80, %v320
    %v322 = vpop.f32.mrb[0].mxu0
    %323 = vmatprep.mubr.f32.mxu0 0.0
    %324 = vmatmul.mubr.f32.gmra.mrb[0].mxu0 %v160
    %v325 = vpop.f32.mrb[0].mxu0
    %v326 = vadd.f32 %v85, %v325
    %v327 = vpop.f32.mrb[0].mxu0
    %328 = vmatprep.mubr.f32.mxu0 0.0
    %329 = vmatmul.mubr.f32.gmra.mrb[0].mxu0 %v163
    %v330 = vpop.f32.mrb[0].mxu0
    %v331 = vadd.f32 %v90, %v330
    %v332 = vpop.f32.mrb[0].mxu0
    %333 = vmatprep.mubr.f32.mxu0 0.0
    %334 = vmatmul.mubr.f32.gmra.mrb[0].mxu0 %v166
    %v335 = vpop.f32.mrb[0].mxu0
    %v336 = vadd.f32 %v95, %v335
    %v337 = vpop.f32.mrb[0].mxu0
    %338 = vmatprep.mubr.f32.mxu0 0.0
    %339 = vmatmul.mubr.f32.gmra.mrb[0].mxu0 %v169
    %v340 = vpop.f32.mrb[0].mxu0
    %v341 = vadd.f32 %v100, %v340
    %v342 = vpop.f32.mrb[0].mxu0
    %343 = vmatprep.mubr.f32.mxu0 0.0
    %344 = vmatmul.mubr.f32.gmra.mrb[0].mxu0 %v172
    %v345 = vpop.f32.mrb[0].mxu0
    %v346 = vadd.f32 %v105, %v345
    %v347 = vpop.f32.mrb[0].mxu0
    %348 = vmatprep.mubr.f32.mxu0 0.0
    %349 = vmatmul.mubr.f32.gmra.mrb[0].mxu0 %v175
    %v350 = vpop.f32.mrb[0].mxu0
    %v351 = vadd.f32 %v110, %v350
    %v352 = vpop.f32.mrb[0].mxu0
    %353 = vmatprep.mubr.f32.mxu0 0.0
    %354 = vmatmul.mubr.f32.gmra.mrb[0].mxu0 %v178
    %v355 = vpop.f32.mrb[0].mxu0
    %v356 = vadd.f32 %v115, %v355
    %v357 = vpop.f32.mrb[0].mxu0
    %358 = vmatprep.mubr.f32.mxu0 0.0
    %359 = vmatmul.mubr.f32.gmra.mrb[0].mxu0 %v181
    %v360 = vpop.f32.mrb[0].mxu0
    %v361 = vadd.f32 %v120, %v360
    %v362 = vpop.f32.mrb[0].mxu0
    %363 = vmatprep.mubr.f32.mxu0 0.0
    %364 = vmatmul.mubr.f32.gmra.mrb[0].mxu0 %v184
    %v365 = vpop.f32.mrb[0].mxu0
    %v366 = vadd.f32 %v125, %v365
    %v367 = vpop.f32.mrb[0].mxu0
    %368 = vmatprep.mubr.f32.mxu0 0.0
    %369 = vmatmul.mubr.f32.gmra.mrb[0].mxu0 %v187
    %v370 = vpop.f32.mrb[0].mxu0
    %v371 = vadd.f32 %v130, %v370
    %v372 = vpop.f32.mrb[0].mxu0
    %373 = vmatprep.mubr.f32.mxu0 0.0
    %374 = vmatmul.mubr.f32.gmra.mrb[0].mxu0 %v190
    %v375 = vpop.f32.mrb[0].mxu0
    %v376 = vadd.f32 %v135, %v375
    %v377 = vpop.f32.mrb[0].mxu0
    %378 = vmatprep.mubr.f32.mxu0 0.0
    %379 = vmatmul.mubr.f32.gmra.mrb[0].mxu0 %v193
    %v380 = vpop.f32.mrb[0].mxu0
    %v381 = vadd.f32 %v140, %v380
    %v382 = vpop.f32.mrb[0].mxu0
    %383 = vmatprep.mubr.f32.mxu0 0.0
    %384 = vmatmul.mubr.f32.gmra.mrb[0].mxu0 %v196
    %v385 = vpop.f32.mrb[0].mxu0
    %v386 = vadd.f32 %v145, %v385
    %v387 = vpop.f32.mrb[0].mxu0
    %388 = vmatprep.mubr.f32.mxu0 0.0
    %389 = vmatmul.mubr.f32.gmra.mrb[0].mxu0 %v199
    %v390 = vpop.f32.mrb[0].mxu0
    %v391 = vadd.f32 %v150, %v390
    %v392 = vpop.f32.mrb[0].mxu0
    %393 = vdwg.mxu0
    %v394 = vmax.f32 %v316, 0.0
    %v395 = vmax.f32 %v321, 0.0
    %v396 = vmax.f32 %v326, 0.0
    %v397 = vmax.f32 %v331, 0.0
    %v398 = vmax.f32 %v336, 0.0
    %v399 = vmax.f32 %v341, 0.0
    %v400 = vmax.f32 %v346, 0.0
    %v401 = vmax.f32 %v351, 0.0
    %v402 = vmax.f32 %v356, 0.0
    %v403 = vmax.f32 %v361, 0.0
    %v404 = vmax.f32 %v366, 0.0
    %v405 = vmax.f32 %v371, 0.0
    %v406 = vmax.f32 %v376, 0.0
    %v407 = vmax.f32 %v381, 0.0
    %v408 = vmax.f32 %v386, 0.0
    %v409 = vmax.f32 %v391, 0.0
    %v410 = vld [vmem:[%s3] sm:$0xff]
    %v411 = vld [vmem:[%s3 + $0x8] sm:$0xff]
    %v412 = vld [vmem:[%s3 + $0x10] sm:$0xff]
    %v413 = vld [vmem:[%s3 + $0x18] sm:$0xff]
    %v414 = vld [vmem:[%s3 + $0x20] sm:$0xff]
    %v415 = vld [vmem:[%s3 + $0x28] sm:$0xff]
    %v416 = vld [vmem:[%s3 + $0x30] sm:$0xff]
    %v417 = vld [vmem:[%s3 + $0x38] sm:$0xff]
    %v418 = vld [vmem:[%s3 + $0x40] sm:$0xff]
    %v419 = vld [vmem:[%s3 + $0x48] sm:$0xff]
    %v420 = vld [vmem:[%s3 + $0x50] sm:$0xff]
    %v421 = vld [vmem:[%s3 + $0x58] sm:$0xff]
    %v422 = vld [vmem:[%s3 + $0x60] sm:$0xff]
    %v423 = vld [vmem:[%s3 + $0x68] sm:$0xff]
    %v424 = vld [vmem:[%s3 + $0x70] sm:$0xff]
    %v425 = vld [vmem:[%s3 + $0x78] sm:$0xff]
    %v426 = vld [vmem:[%s3 + $0x80] sm:$0xff]
    %v427 = vld [vmem:[%s3 + $0x88] sm:$0xff]
    %v428 = vld [vmem:[%s3 + $0x90] sm:$0xff]
    %v429 = vld [vmem:[%s3 + $0x98] sm:$0xff]
    %v430 = vld [vmem:[%s3 + $0xa0] sm:$0xff]
    %v431 = vld [vmem:[%s3 + $0xa8] sm:$0xff]
    %v432 = vld [vmem:[%s3 + $0xb0] sm:$0xff]
    %v433 = vld [vmem:[%s3 + $0xb8] sm:$0xff]
    %v434 = vld [vmem:[%s3 + $0xc0] sm:$0xff]
    %v435 = vld [vmem:[%s3 + $0xc8] sm:$0xff]
    %v436 = vld [vmem:[%s3 + $0xd0] sm:$0xff]
    %v437 = vld [vmem:[%s3 + $0xd8] sm:$0xff]
    %v438 = vld [vmem:[%s3 + $0xe0] sm:$0xff]
    %v439 = vld [vmem:[%s3 + $0xe8] sm:$0xff]
    %v440 = vld [vmem:[%s3 + $0xf0] sm:$0xff]
    %v441 = vld [vmem:[%s3 + $0xf8] sm:$0xff]
    %v442 = vld [vmem:[%s4] sm:$0xff]
    %v443 = vld [vmem:[%s4 + $0x8] sm:$0xff]
    %v444 = vld [vmem:[%s4 + $0x10] sm:$0xff]
    %v445 = vld [vmem:[%s4 + $0x18] sm:$0xff]
    %v446 = vld [vmem:[%s4 + $0x20] sm:$0xff]
    %v447 = vld [vmem:[%s4 + $0x28] sm:$0xff]
    %v448 = vld [vmem:[%s4 + $0x30] sm:$0xff]
    %v449 = vld [vmem:[%s4 + $0x38] sm:$0xff]
    %v450 = vld [vmem:[%s4 + $0x40] sm:$0xff]
    %v451 = vld [vmem:[%s4 + $0x48] sm:$0xff]
    %v452 = vld [vmem:[%s4 + $0x50] sm:$0xff]
    %v453 = vld [vmem:[%s4 + $0x58] sm:$0xff]
    %v454 = vld [vmem:[%s4 + $0x60] sm:$0xff]
    %v455 = vld [vmem:[%s4 + $0x68] sm:$0xff]
    %v456 = vld [vmem:[%s4 + $0x70] sm:$0xff]
    %v457 = vld [vmem:[%s4 + $0x78] sm:$0xff]
    %v458 = vld [vmem:[%s4 + $0x80] sm:$0xff]
    %v459 = vld [vmem:[%s4 + $0x88] sm:$0xff]
    %v460 = vld [vmem:[%s4 + $0x90] sm:$0xff]
    %v461 = vld [vmem:[%s4 + $0x98] sm:$0xff]
    %v462 = vld [vmem:[%s4 + $0xa0] sm:$0xff]
    %v463 = vld [vmem:[%s4 + $0xa8] sm:$0xff]
    %v464 = vld [vmem:[%s4 + $0xb0] sm:$0xff]
    %v465 = vld [vmem:[%s4 + $0xb8] sm:$0xff]
    %v466 = vld [vmem:[%s4 + $0xc0] sm:$0xff]
    %v467 = vld [vmem:[%s4 + $0xc8] sm:$0xff]
    %v468 = vld [vmem:[%s4 + $0xd0] sm:$0xff]
    %v469 = vld [vmem:[%s4 + $0xd8] sm:$0xff]
    %v470 = vld [vmem:[%s4 + $0xe0] sm:$0xff]
    %v471 = vld [vmem:[%s4 + $0xe8] sm:$0xff]
    %v472 = vld [vmem:[%s4 + $0xf0] sm:$0xff]
    %v473 = vld [vmem:[%s4 + $0xf8] sm:$0xff]
    %475 = vset.pattern.permute.xlu0 0
    %476 = vperm.xlu0 %475, %v442
    %v477 = vpop.permute.xlu0 %476
    %480 = vset.pattern.permute.xlu0 0
    %481 = vperm.xlu0 %480, %v443
    %v482 = vpop.permute.xlu0 %481
    %485 = vset.pattern.permute.xlu0 0
    %486 = vperm.xlu0 %485, %v444
    %v487 = vpop.permute.xlu0 %486
    %490 = vset.pattern.permute.xlu0 0
    %491 = vperm.xlu0 %490, %v445
    %v492 = vpop.permute.xlu0 %491
    %495 = vset.pattern.permute.xlu0 0
    %496 = vperm.xlu0 %495, %v446
    %v497 = vpop.permute.xlu0 %496
    %500 = vset.pattern.permute.xlu0 0
    %501 = vperm.xlu0 %500, %v447
    %v502 = vpop.permute.xlu0 %501
    %505 = vset.pattern.permute.xlu0 0
    %506 = vperm.xlu0 %505, %v448
    %v507 = vpop.permute.xlu0 %506
    %510 = vset.pattern.permute.xlu0 0
    %511 = vperm.xlu0 %510, %v449
    %v512 = vpop.permute.xlu0 %511
    %515 = vset.pattern.permute.xlu0 0
    %516 = vperm.xlu0 %515, %v450
    %v517 = vpop.permute.xlu0 %516
    %520 = vset.pattern.permute.xlu0 0
    %521 = vperm.xlu0 %520, %v451
    %v522 = vpop.permute.xlu0 %521
    %525 = vset.pattern.permute.xlu0 0
    %526 = vperm.xlu0 %525, %v452
    %v527 = vpop.permute.xlu0 %526
    %530 = vset.pattern.permute.xlu0 0
    %531 = vperm.xlu0 %530, %v453
    %v532 = vpop.permute.xlu0 %531
    %535 = vset.pattern.permute.xlu0 0
    %536 = vperm.xlu0 %535, %v454
    %v537 = vpop.permute.xlu0 %536
    %540 = vset.pattern.permute.xlu0 0
    %541 = vperm.xlu0 %540, %v455
    %v542 = vpop.permute.xlu0 %541
    %545 = vset.pattern.permute.xlu0 0
    %546 = vperm.xlu0 %545, %v456
    %v547 = vpop.permute.xlu0 %546
    %550 = vset.pattern.permute.xlu0 0
    %551 = vperm.xlu0 %550, %v457
    %v552 = vpop.permute.xlu0 %551
    %555 = vset.pattern.permute.xlu0 0
    %556 = vperm.xlu0 %555, %v458
    %v557 = vpop.permute.xlu0 %556
    %560 = vset.pattern.permute.xlu0 0
    %561 = vperm.xlu0 %560, %v459
    %v562 = vpop.permute.xlu0 %561
    %565 = vset.pattern.permute.xlu0 0
    %566 = vperm.xlu0 %565, %v460
    %v567 = vpop.permute.xlu0 %566
    %570 = vset.pattern.permute.xlu0 0
    %571 = vperm.xlu0 %570, %v461
    %v572 = vpop.permute.xlu0 %571
    %575 = vset.pattern.permute.xlu0 0
    %576 = vperm.xlu0 %575, %v462
    %v577 = vpop.permute.xlu0 %576
    %580 = vset.pattern.permute.xlu0 0
    %581 = vperm.xlu0 %580, %v463
    %v582 = vpop.permute.xlu0 %581
    %585 = vset.pattern.permute.xlu0 0
    %586 = vperm.xlu0 %585, %v464
    %v587 = vpop.permute.xlu0 %586
    %590 = vset.pattern.permute.xlu0 0
    %591 = vperm.xlu0 %590, %v465
    %v592 = vpop.permute.xlu0 %591
    %595 = vset.pattern.permute.xlu0 0
    %596 = vperm.xlu0 %595, %v466
    %v597 = vpop.permute.xlu0 %596
    %600 = vset.pattern.permute.xlu0 0
    %601 = vperm.xlu0 %600, %v467
    %v602 = vpop.permute.xlu0 %601
    %605 = vset.pattern.permute.xlu0 0
    %606 = vperm.xlu0 %605, %v468
    %v607 = vpop.permute.xlu0 %606
    %610 = vset.pattern.permute.xlu0 0
    %611 = vperm.xlu0 %610, %v469
    %v612 = vpop.permute.xlu0 %611
    %615 = vset.pattern.permute.xlu0 0
    %616 = vperm.xlu0 %615, %v470
    %v617 = vpop.permute.xlu0 %616
    %620 = vset.pattern.permute.xlu0 0
    %621 = vperm.xlu0 %620, %v471
    %v622 = vpop.permute.xlu0 %621
    %625 = vset.pattern.permute.xlu0 0
    %626 = vperm.xlu0 %625, %v472
    %v627 = vpop.permute.xlu0 %626
    %630 = vset.pattern.permute.xlu0 0
    %631 = vperm.xlu0 %630, %v473
    %v632 = vpop.permute.xlu0 %631
    %634 = vmatprep.subr.mxu0 0.0
    %635 = vmatpush1.msra.mxu0 %v394
    %636 = vmatprep.subr.mxu0 0.0
    %637 = vmatpush1.msra.mxu0 %v395
    %638 = vmatprep.subr.mxu0 0.0
    %639 = vmatpush1.msra.mxu0 %v396
    %640 = vmatprep.subr.mxu0 0.0
    %641 = vmatpush1.msra.mxu0 %v397
    %642 = vmatprep.subr.mxu0 0.0
    %643 = vmatpush1.msra.mxu0 %v398
    %644 = vmatprep.subr.mxu0 0.0
    %645 = vmatpush1.msra.mxu0 %v399
    %646 = vmatprep.subr.mxu0 0.0
    %647 = vmatpush1.msra.mxu0 %v400
    %648 = vmatprep.subr.mxu0 0.0
    %649 = vmatpush1.msra.mxu0 %v401
    %650 = vmatprep.subr.mxu0 0.0
    %651 = vmatpush1.msra.mxu0 %v402
    %652 = vmatprep.subr.mxu0 0.0
    %653 = vmatpush1.msra.mxu0 %v403
    %654 = vmatprep.subr.mxu0 0.0
    %655 = vmatpush1.msra.mxu0 %v404
    %656 = vmatprep.subr.mxu0 0.0
    %657 = vmatpush1.msra.mxu0 %v405
    %658 = vmatprep.subr.mxu0 0.0
    %659 = vmatpush1.msra.mxu0 %v406
    %660 = vmatprep.subr.mxu0 0.0
    %661 = vmatpush1.msra.mxu0 %v407
    %662 = vmatprep.subr.mxu0 0.0
    %663 = vmatpush1.msra.mxu0 %v408
    %664 = vmatprep.subr.mxu0 0.0
    %665 = vmatpush1.msra.mxu0 %v409
    %666 = vmatprep.subr.mxu0 0.0
    %667 = vmatpush1.msra.mxu0 0.0
    %668 = vmatprep.subr.mxu0 0.0
    %669 = vmatpush1.msra.mxu0 0.0
    %670 = vmatprep.subr.mxu0 0.0
    %671 = vmatpush1.msra.mxu0 0.0
    %672 = vmatprep.subr.mxu0 0.0
    %673 = vmatpush1.msra.mxu0 0.0
    %674 = vmatprep.subr.mxu0 0.0
    %675 = vmatpush1.msra.mxu0 0.0
    %676 = vmatprep.subr.mxu0 0.0
    %677 = vmatpush1.msra.mxu0 0.0
    %678 = vmatprep.subr.mxu0 0.0
    %679 = vmatpush1.msra.mxu0 0.0
    %680 = vmatprep.subr.mxu0 0.0
    %681 = vmatpush1.msra.mxu0 0.0
    %682 = vmatprep.subr.mxu0 0.0
    %683 = vmatpush1.msra.mxu0 0.0
    %684 = vmatprep.subr.mxu0 0.0
    %685 = vmatpush1.msra.mxu0 0.0
    %686 = vmatprep.subr.mxu0 0.0
    %687 = vmatpush1.msra.mxu0 0.0
    %688 = vmatprep.subr.mxu0 0.0
    %689 = vmatpush1.msra.mxu0 0.0
    %690 = vmatprep.subr.mxu0 0.0
    %691 = vmatpush1.msra.mxu0 0.0
    %692 = vmatprep.subr.mxu0 0.0
    %693 = vmatpush1.msra.mxu0 0.0
    %694 = vmatprep.subr.mxu0 0.0
    %695 = vmatpush1.msra.mxu0 0.0
    %696 = vmatprep.subr.mxu0 0.0
    %697 = vmatpush1.msra.mxu0 0.0
    %698 = vmatprep.mubr.f32.mxu0 0.0
    %699 = vmatmul.mubr.f32.gmra.mrb[0].mxu0 %v410
    %v700 = vpop.f32.mrb[0].mxu0
    %v701 = vadd.f32 %v477, %v700
    %v702 = vpop.f32.mrb[0].mxu0
    %703 = vmatprep.mubr.f32.mxu0 0.0
    %704 = vmatmul.mubr.f32.gmra.mrb[0].mxu0 %v411
    %v705 = vpop.f32.mrb[0].mxu0
    %v706 = vadd.f32 %v482, %v705
    %v707 = vpop.f32.mrb[0].mxu0
    %708 = vmatprep.mubr.f32.mxu0 0.0
    %709 = vmatmul.mubr.f32.gmra.mrb[0].mxu0 %v412
    %v710 = vpop.f32.mrb[0].mxu0
    %v711 = vadd.f32 %v487, %v710
    %v712 = vpop.f32.mrb[0].mxu0
    %713 = vmatprep.mubr.f32.mxu0 0.0
    %714 = vmatmul.mubr.f32.gmra.mrb[0].mxu0 %v413
    %v715 = vpop.f32.mrb[0].mxu0
    %v716 = vadd.f32 %v492, %v715
    %v717 = vpop.f32.mrb[0].mxu0
    %718 = vmatprep.mubr.f32.mxu0 0.0
    %719 = vmatmul.mubr.f32.gmra.mrb[0].mxu0 %v414
    %v720 = vpop.f32.mrb[0].mxu0
    %v721 = vadd.f32 %v497, %v720
    %v722 = vpop.f32.mrb[0].mxu0
    %723 = vmatprep.mubr.f32.mxu0 0.0
    %724 = vmatmul.mubr.f32.gmra.mrb[0].mxu0 %v415
    %v725 = vpop.f32.mrb[0].mxu0
    %v726 = vadd.f32 %v502, %v725
    %v727 = vpop.f32.mrb[0].mxu0
    %728 = vmatprep.mubr.f32.mxu0 0.0
    %729 = vmatmul.mubr.f32.gmra.mrb[0].mxu0 %v416
    %v730 = vpop.f32.mrb[0].mxu0
    %v731 = vadd.f32 %v507, %v730
    %v732 = vpop.f32.mrb[0].mxu0
    %733 = vmatprep.mubr.f32.mxu0 0.0
    %734 = vmatmul.mubr.f32.gmra.mrb[0].mxu0 %v417
    %v735 = vpop.f32.mrb[0].mxu0
    %v736 = vadd.f32 %v512, %v735
    %v737 = vpop.f32.mrb[0].mxu0
    %738 = vmatprep.mubr.f32.mxu0 0.0
    %739 = vmatmul.mubr.f32.gmra.mrb[0].mxu0 %v418
    %v740 = vpop.f32.mrb[0].mxu0
    %v741 = vadd.f32 %v517, %v740
    %v742 = vpop.f32.mrb[0].mxu0
    %743 = vmatprep.mubr.f32.mxu0 0.0
    %744 = vmatmul.mubr.f32.gmra.mrb[0].mxu0 %v419
    %v745 = vpop.f32.mrb[0].mxu0
    %v746 = vadd.f32 %v522, %v745
    %v747 = vpop.f32.mrb[0].mxu0
    %748 = vmatprep.mubr.f32.mxu0 0.0
    %749 = vmatmul.mubr.f32.gmra.mrb[0].mxu0 %v420
    %v750 = vpop.f32.mrb[0].mxu0
    %v751 = vadd.f32 %v527, %v750
    %v752 = vpop.f32.mrb[0].mxu0
    %753 = vmatprep.mubr.f32.mxu0 0.0
    %754 = vmatmul.mubr.f32.gmra.mrb[0].mxu0 %v421
    %v755 = vpop.f32.mrb[0].mxu0
    %v756 = vadd.f32 %v532, %v755
    %v757 = vpop.f32.mrb[0].mxu0
    %758 = vmatprep.mubr.f32.mxu0 0.0
    %759 = vmatmul.mubr.f32.gmra.mrb[0].mxu0 %v422
    %v760 = vpop.f32.mrb[0].mxu0
    %v761 = vadd.f32 %v537, %v760
    %v762 = vpop.f32.mrb[0].mxu0
    %763 = vmatprep.mubr.f32.mxu0 0.0
    %764 = vmatmul.mubr.f32.gmra.mrb[0].mxu0 %v423
    %v765 = vpop.f32.mrb[0].mxu0
    %v766 = vadd.f32 %v542, %v765
    %v767 = vpop.f32.mrb[0].mxu0
    %768 = vmatprep.mubr.f32.mxu0 0.0
    %769 = vmatmul.mubr.f32.gmra.mrb[0].mxu0 %v424
    %v770 = vpop.f32.mrb[0].mxu0
    %v771 = vadd.f32 %v547, %v770
    %v772 = vpop.f32.mrb[0].mxu0
    %773 = vmatprep.mubr.f32.mxu0 0.0
    %774 = vmatmul.mubr.f32.gmra.mrb[0].mxu0 %v425
    %v775 = vpop.f32.mrb[0].mxu0
    %v776 = vadd.f32 %v552, %v775
    %v777 = vpop.f32.mrb[0].mxu0
    %778 = vmatprep.mubr.f32.mxu0 0.0
    %779 = vmatmul.mubr.f32.gmra.mrb[0].mxu0 %v426
    %v780 = vpop.f32.mrb[0].mxu0
    %v781 = vadd.f32 %v557, %v780
    %v782 = vpop.f32.mrb[0].mxu0
    %783 = vmatprep.mubr.f32.mxu0 0.0
    %784 = vmatmul.mubr.f32.gmra.mrb[0].mxu0 %v427
    %v785 = vpop.f32.mrb[0].mxu0
    %v786 = vadd.f32 %v562, %v785
    %v787 = vpop.f32.mrb[0].mxu0
    %788 = vmatprep.mubr.f32.mxu0 0.0
    %789 = vmatmul.mubr.f32.gmra.mrb[0].mxu0 %v428
    %v790 = vpop.f32.mrb[0].mxu0
    %v791 = vadd.f32 %v567, %v790
    %v792 = vpop.f32.mrb[0].mxu0
    %793 = vmatprep.mubr.f32.mxu0 0.0
    %794 = vmatmul.mubr.f32.gmra.mrb[0].mxu0 %v429
    %v795 = vpop.f32.mrb[0].mxu0
    %v796 = vadd.f32 %v572, %v795
    %v797 = vpop.f32.mrb[0].mxu0
    %798 = vmatprep.mubr.f32.mxu0 0.0
    %799 = vmatmul.mubr.f32.gmra.mrb[0].mxu0 %v430
    %v800 = vpop.f32.mrb[0].mxu0
    %v801 = vadd.f32 %v577, %v800
    %v802 = vpop.f32.mrb[0].mxu0
    %803 = vmatprep.mubr.f32.mxu0 0.0
    %804 = vmatmul.mubr.f32.gmra.mrb[0].mxu0 %v431
    %v805 = vpop.f32.mrb[0].mxu0
    %v806 = vadd.f32 %v582, %v805
    %v807 = vpop.f32.mrb[0].mxu0
    %808 = vmatprep.mubr.f32.mxu0 0.0
    %809 = vmatmul.mubr.f32.gmra.mrb[0].mxu0 %v432
    %v810 = vpop.f32.mrb[0].mxu0
    %v811 = vadd.f32 %v587, %v810
    %v812 = vpop.f32.mrb[0].mxu0
    %813 = vmatprep.mubr.f32.mxu0 0.0
    %814 = vmatmul.mubr.f32.gmra.mrb[0].mxu0 %v433
    %v815 = vpop.f32.mrb[0].mxu0
    %v816 = vadd.f32 %v592, %v815
    %v817 = vpop.f32.mrb[0].mxu0
    %818 = vmatprep.mubr.f32.mxu0 0.0
    %819 = vmatmul.mubr.f32.gmra.mrb[0].mxu0 %v434
    %v820 = vpop.f32.mrb[0].mxu0
    %v821 = vadd.f32 %v597, %v820
    %v822 = vpop.f32.mrb[0].mxu0
    %823 = vmatprep.mubr.f32.mxu0 0.0
    %824 = vmatmul.mubr.f32.gmra.mrb[0].mxu0 %v435
    %v825 = vpop.f32.mrb[0].mxu0
    %v826 = vadd.f32 %v602, %v825
    %v827 = vpop.f32.mrb[0].mxu0
    %828 = vmatprep.mubr.f32.mxu0 0.0
    %829 = vmatmul.mubr.f32.gmra.mrb[0].mxu0 %v436
    %v830 = vpop.f32.mrb[0].mxu0
    %v831 = vadd.f32 %v607, %v830
    %v832 = vpop.f32.mrb[0].mxu0
    %833 = vmatprep.mubr.f32.mxu0 0.0
    %834 = vmatmul.mubr.f32.gmra.mrb[0].mxu0 %v437
    %v835 = vpop.f32.mrb[0].mxu0
    %v836 = vadd.f32 %v612, %v835
    %v837 = vpop.f32.mrb[0].mxu0
    %838 = vmatprep.mubr.f32.mxu0 0.0
    %839 = vmatmul.mubr.f32.gmra.mrb[0].mxu0 %v438
    %v840 = vpop.f32.mrb[0].mxu0
    %v841 = vadd.f32 %v617, %v840
    %v842 = vpop.f32.mrb[0].mxu0
    %843 = vmatprep.mubr.f32.mxu0 0.0
    %844 = vmatmul.mubr.f32.gmra.mrb[0].mxu0 %v439
    %v845 = vpop.f32.mrb[0].mxu0
    %v846 = vadd.f32 %v622, %v845
    %v847 = vpop.f32.mrb[0].mxu0
    %848 = vmatprep.mubr.f32.mxu0 0.0
    %849 = vmatmul.mubr.f32.gmra.mrb[0].mxu0 %v440
    %v850 = vpop.f32.mrb[0].mxu0
    %v851 = vadd.f32 %v627, %v850
    %v852 = vpop.f32.mrb[0].mxu0
    %853 = vmatprep.mubr.f32.mxu0 0.0
    %854 = vmatmul.mubr.f32.gmra.mrb[0].mxu0 %v441
    %v855 = vpop.f32.mrb[0].mxu0
    %v856 = vadd.f32 %v632, %v855
    %v857 = vpop.f32.mrb[0].mxu0
    %858 = vdwg.mxu0
    %v859 = vmax.f32 %v701, 0.0
    %v860 = vmax.f32 %v706, 0.0
    %v861 = vmax.f32 %v711, 0.0
    %v862 = vmax.f32 %v716, 0.0
    %v863 = vmax.f32 %v721, 0.0
    %v864 = vmax.f32 %v726, 0.0
    %v865 = vmax.f32 %v731, 0.0
    %v866 = vmax.f32 %v736, 0.0
    %v867 = vmax.f32 %v741, 0.0
    %v868 = vmax.f32 %v746, 0.0
    %v869 = vmax.f32 %v751, 0.0
    %v870 = vmax.f32 %v756, 0.0
    %v871 = vmax.f32 %v761, 0.0
    %v872 = vmax.f32 %v766, 0.0
    %v873 = vmax.f32 %v771, 0.0
    %v874 = vmax.f32 %v776, 0.0
    %v875 = vmax.f32 %v781, 0.0
    %v876 = vmax.f32 %v786, 0.0
    %v877 = vmax.f32 %v791, 0.0
    %v878 = vmax.f32 %v796, 0.0
    %v879 = vmax.f32 %v801, 0.0
    %v880 = vmax.f32 %v806, 0.0
    %v881 = vmax.f32 %v811, 0.0
    %v882 = vmax.f32 %v816, 0.0
    %v883 = vmax.f32 %v821, 0.0
    %v884 = vmax.f32 %v826, 0.0
    %v885 = vmax.f32 %v831, 0.0
    %v886 = vmax.f32 %v836, 0.0
    %v887 = vmax.f32 %v841, 0.0
    %v888 = vmax.f32 %v846, 0.0
    %v889 = vmax.f32 %v851, 0.0
    %v890 = vmax.f32 %v856, 0.0
    %v891 = vld [vmem:[%s5] sm:$0x3]
    %v893 = vlaneseq
    %v894 = vshrl.u32 %v893, 7
    %v895 = vsub.s32 0, %v894
    %v896 = vrot.slane %v891, %v895
    %v897 = vlaneseq
    %v898 = vshrl.u32 %v897, 7
    %v899 = vsub.s32 1, %v898
    %v900 = vrot.slane %v891, %v899
    %903 = vmatprep.subr.mxu0 0.0
    %904 = vmatpush1.msra.mxu0 %v859
    %905 = vmatprep.subr.mxu0 0.0
    %906 = vmatpush1.msra.mxu0 %v860
    %907 = vmatprep.subr.mxu0 0.0
    %908 = vmatpush1.msra.mxu0 %v861
    %909 = vmatprep.subr.mxu0 0.0
    %910 = vmatpush1.msra.mxu0 %v862
    %911 = vmatprep.subr.mxu0 0.0
    %912 = vmatpush1.msra.mxu0 %v863
    %913 = vmatprep.subr.mxu0 0.0
    %914 = vmatpush1.msra.mxu0 %v864
    %915 = vmatprep.subr.mxu0 0.0
    %916 = vmatpush1.msra.mxu0 %v865
    %917 = vmatprep.subr.mxu0 0.0
    %918 = vmatpush1.msra.mxu0 %v866
    %919 = vmatprep.subr.mxu0 0.0
    %920 = vmatpush1.msra.mxu0 %v867
    %921 = vmatprep.subr.mxu0 0.0
    %922 = vmatpush1.msra.mxu0 %v868
    %923 = vmatprep.subr.mxu0 0.0
    %924 = vmatpush1.msra.mxu0 %v869
    %925 = vmatprep.subr.mxu0 0.0
    %926 = vmatpush1.msra.mxu0 %v870
    %927 = vmatprep.subr.mxu0 0.0
    %928 = vmatpush1.msra.mxu0 %v871
    %929 = vmatprep.subr.mxu0 0.0
    %930 = vmatpush1.msra.mxu0 %v872
    %931 = vmatprep.subr.mxu0 0.0
    %932 = vmatpush1.msra.mxu0 %v873
    %933 = vmatprep.subr.mxu0 0.0
    %934 = vmatpush1.msra.mxu0 %v874
    %935 = vmatprep.subr.mxu0 0.0
    %936 = vmatpush1.msra.mxu0 %v875
    %937 = vmatprep.subr.mxu0 0.0
    %938 = vmatpush1.msra.mxu0 %v876
    %939 = vmatprep.subr.mxu0 0.0
    %940 = vmatpush1.msra.mxu0 %v877
    %941 = vmatprep.subr.mxu0 0.0
    %942 = vmatpush1.msra.mxu0 %v878
    %943 = vmatprep.subr.mxu0 0.0
    %944 = vmatpush1.msra.mxu0 %v879
    %945 = vmatprep.subr.mxu0 0.0
    %946 = vmatpush1.msra.mxu0 %v880
    %947 = vmatprep.subr.mxu0 0.0
    %948 = vmatpush1.msra.mxu0 %v881
    %949 = vmatprep.subr.mxu0 0.0
    %950 = vmatpush1.msra.mxu0 %v882
    %951 = vmatprep.subr.mxu0 0.0
    %952 = vmatpush1.msra.mxu0 %v883
    %953 = vmatprep.subr.mxu0 0.0
    %954 = vmatpush1.msra.mxu0 %v884
    %955 = vmatprep.subr.mxu0 0.0
    %956 = vmatpush1.msra.mxu0 %v885
    %957 = vmatprep.subr.mxu0 0.0
    %958 = vmatpush1.msra.mxu0 %v886
    %959 = vmatprep.subr.mxu0 0.0
    %960 = vmatpush1.msra.mxu0 %v887
    %961 = vmatprep.subr.mxu0 0.0
    %962 = vmatpush1.msra.mxu0 %v888
    %963 = vmatprep.subr.mxu0 0.0
    %964 = vmatpush1.msra.mxu0 %v889
    %965 = vmatprep.subr.mxu0 0.0
    %966 = vmatpush1.msra.mxu0 %v890
    %967 = vmatprep.mubr.f32.mxu0 %v900
    %968 = vmatmul.mubr.f32.gmra.mrb[0].mxu0 %v896
    %v969 = vpop.f32.mrb[0].mxu0
    %v970 = vadd.f32 0.0, %v969
    %v971 = vpop.f32.mrb[0].mxu0
    %972 = vdwg.mxu0
    %973 = vst [vmem:[#allocation2] sm:$0x1] %v970
    // Predicated region
    $region26: #{tpu_custom_call.1} parent=1 // pred_check
      _
    $region27: #{tpu_custom_call.1} parent=1 // pred_check_branch
      %975 = sbr.rel (0) target = $region29
    $region28: #{tpu_custom_call.1} parent=1 // pred_region
      %s977 = ssub.s32 16, 16
      %978 = vsyncadd [#allocation3], %s977
      %s980 = sshll.u32 [#allocation2], 4
      %s981 = int_to_ptr.vmem [resolvable:$true] %s980
      %983 = dma.vmem_to_hbm [thread:$0]  %s981, 16, %s6, [#allocation3]
    $region29: #{tpu_custom_call.1} parent=1 // pred_fallthru
      _
    // Predicated region
    $region30: #{tpu_custom_call.1} parent=1 // pred_check
      _
    $region31: #{tpu_custom_call.1} parent=1 // pred_check_branch
      %985 = sbr.rel (0) target = $region33
    $region32: #{tpu_custom_call.1} parent=1 // pred_region
      %986 = dma.done [#allocation3], 16
    $region33: #{tpu_custom_call.1} parent=1 // pred_fallthru
      _
    %987 = vsyncpa [#allocation3], 1

</llo_original>
